<compile_context>
chip_gen: v5e
topology: v5e:2x2
jax: 0.10.0
libtpu: 0.0.40
codegen_flags: <defaults>
</compile_context>

<pallas_src>
import jax
import jax.numpy as jnp
from jax.experimental import pallas as pl
from jax.experimental.pallas import tpu as pltpu


def _round_up(a, b):
    return (a + b - 1) // b * b


def _gelu_tanh(x):
    # GELU with tanh approximation, matching nn.GELU(approximate='tanh')
    c = jnp.sqrt(2.0 / jnp.pi).astype(x.dtype)
    return 0.5 * x * (1.0 + jnp.tanh(c * (x + 0.044715 * x * x * x)))


def mlp_kernel(x_ref, w_up_ref, b_up_ref, w_down_ref, b_down_ref, o_ref, acc_ref):
    # grid = (row tiles [parallel], hidden-chunk tiles [arbitrary / reduction])
    # x_ref:      (tm, D)      bf16
    # w_up_ref:   (D, th)      bf16      b_up_ref:   (1, th) f32
    # w_down_ref: (th, D)      bf16      b_down_ref: (1, D)  f32
    # o_ref:      (tm, D)      out dtype
    # acc_ref:    (tm, D)      f32 accumulator (resident across the H axis)
    j = pl.program_id(1)

    @pl.when(j == 0)
    def _():
        acc_ref[...] = jnp.zeros_like(acc_ref)

    # up-projection chunk (MXU, bf16 in / f32 acc) + bias in f32
    h = jnp.dot(x_ref[...], w_up_ref[...], preferred_element_type=jnp.float32)
    h = h + b_up_ref[...]

    # tanh-GELU in f32 (VPU + EUP)
    g = _gelu_tanh(h)

    # down-projection chunk, accumulate in f32
    acc_ref[...] += jnp.dot(g.astype(w_down_ref.dtype), w_down_ref[...],
                            preferred_element_type=jnp.float32)

    @pl.when(j == pl.num_programs(1) - 1)
    def _():
        o_ref[...] = (acc_ref[...] + b_down_ref[...]).astype(o_ref.dtype)


def mlp_forward(x, w_up, b_up, w_down, b_down, *, tm=256, th=512):
    """x: (B, T, D). w_up: (D, 4D), b_up: (4D,), w_down: (4D, D), b_down: (D,)."""
    B, T, D = x.shape
    H = w_up.shape[1]
    M = B * T
    out_dtype = x.dtype
    out_itemsize = jnp.dtype(out_dtype).itemsize

    # ---- tiling (lane-dense, MXU-sized where the problem allows) ----
    tm_eff = tm if M >= tm else _round_up(M, 8)
    M_pad = _round_up(M, tm_eff)
    D_pad = _round_up(D, 128)
    H_pad = _round_up(H, 128)
    th_eff = min(th, H_pad)
    H_pad = _round_up(H_pad, th_eff)

    # ---- pad (zeros are inert for this computation) + cast to bf16 ----
    x2 = jnp.pad(x.reshape(M, D), ((0, M_pad - M), (0, D_pad - D))).astype(jnp.bfloat16)
    w_up_p = jnp.pad(w_up, ((0, D_pad - D), (0, H_pad - H))).astype(jnp.bfloat16)
    w_down_p = jnp.pad(w_down, ((0, H_pad - H), (0, D_pad - D))).astype(jnp.bfloat16)
    b_up_p = jnp.pad(b_up, (0, H_pad - H)).reshape(1, H_pad).astype(jnp.float32)
    b_down_p = jnp.pad(b_down, (0, D_pad - D)).reshape(1, D_pad).astype(jnp.float32)

    grid = (M_pad // tm_eff, H_pad // th_eff)

    # ---- VMEM budget: double-buffered tiles + f32 accumulator, with headroom ----
    est = 2 * (tm_eff * D_pad * 2            # x tile (bf16)
               + D_pad * th_eff * 2          # W_up tile (bf16)
               + th_eff * D_pad * 2          # W_down tile (bf16)
               + th_eff * 4 + D_pad * 4      # bias tiles (f32)
               + tm_eff * D_pad * out_itemsize)  # output tile
    est += tm_eff * D_pad * 4                # accumulator scratch
    vmem_limit = int(min(100 * 2**20, max(32 * 2**20, est * 3 // 2)))

    cost = pl.CostEstimate(
        flops=4 * M_pad * D_pad * H_pad,           # two matmuls
        transcendentals=M_pad * H_pad,             # tanh per hidden element
        bytes_accessed=(M_pad * D_pad * 2
                        + grid[0] * (D_pad * H_pad * 2 + H_pad * D_pad * 2)
                        + M_pad * D_pad * out_itemsize
                        + H_pad * 4 + D_pad * 4),
    )

    out_p = pl.pallas_call(
        mlp_kernel,
        out_shape=jax.ShapeDtypeStruct((M_pad, D_pad), out_dtype),
        grid_spec=pltpu.PrefetchScalarGridSpec(
            num_scalar_prefetch=0,
            grid=grid,
            in_specs=[
                pl.BlockSpec((tm_eff, D_pad), lambda i, j: (i, 0)),   # x rows
                pl.BlockSpec((D_pad, th_eff), lambda i, j: (0, j)),   # W_up chunk
                pl.BlockSpec((1, th_eff), lambda i, j: (0, j)),       # b_up chunk
                pl.BlockSpec((th_eff, D_pad), lambda i, j: (j, 0)),   # W_down chunk
                pl.BlockSpec((1, D_pad), lambda i, j: (0, 0)),        # b_down
            ],
            out_specs=pl.BlockSpec((tm_eff, D_pad), lambda i, j: (i, 0)),
            scratch_shapes=[pltpu.VMEM((tm_eff, D_pad), jnp.float32)],
        ),
        compiler_params=pltpu.CompilerParams(
            dimension_semantics=("parallel", "arbitrary"),
            vmem_limit_bytes=vmem_limit,
        ),
        cost_estimate=cost,
    )(x2, w_up_p, b_up_p, w_down_p, b_down_p)

    return out_p[:M, :D].reshape(B, T, D)


def reference_mlp(x, w_up, b_up, w_down, b_down):
    h = jnp.einsum('btd,dh->bth', x, w_up) + b_up
    g = _gelu_tanh(h)
    return jnp.einsum('bth,hd->btd', g, w_down) + b_down


if __name__ == "__main__":
    # Small GPTConfig-like dimensions
    d_embed = 32
    batch, seq = 2, 8
    hidden = 4 * d_embed  # 128

    key = jax.random.PRNGKey(0)
    kx, k1, k2, k3, k4 = jax.random.split(key, 5)

    x = jax.random.normal(kx, (batch, seq, d_embed), dtype=jnp.float32)

    # Deterministic synthetic parameters (stored as [in, out], i.e. PyTorch W^T)
    w_up = jax.random.normal(k1, (d_embed, hidden), dtype=jnp.float32) * 0.02
    b_up = jax.random.normal(k2, (hidden,), dtype=jnp.float32) * 0.02
    w_down = jax.random.normal(k3, (hidden, d_embed), dtype=jnp.float32) * 0.02
    b_down = jax.random.normal(k4, (d_embed,), dtype=jnp.float32) * 0.02

    out = mlp_forward(x, w_up, b_up, w_down, b_down)
    out = jax.block_until_ready(out)

    ref = reference_mlp(x, w_up, b_up, w_down, b_down)
    assert out.shape == (batch, seq, d_embed)
    # bf16 weights/activations in the kernel -> loosened tolerance vs f32 reference
    assert jnp.allclose(out, ref, atol=1e-2, rtol=1e-2), "mismatch vs reference"

    print("KERNEL_OK")
</pallas_src>

<mosaic_0001>
module attributes {stable_mosaic.version = 11 : i64} {
  func.func @mlp_kernel(%arg0: i32, %arg1: i32, %arg2: memref<16x128xbf16, #tpu.memory_space<vmem>>, %arg3: memref<128x128xbf16, #tpu.memory_space<vmem>>, %arg4: memref<1x128xf32, #tpu.memory_space<vmem>>, %arg5: memref<128x128xbf16, #tpu.memory_space<vmem>>, %arg6: memref<1x128xf32, #tpu.memory_space<vmem>>, %arg7: memref<16x128xf32, #tpu.memory_space<vmem>>, %arg8: memref<16x128xf32, #tpu.memory_space<vmem>>) attributes {dimension_semantics = [#tpu.dimension_semantics<parallel>, #tpu.dimension_semantics<arbitrary>], iteration_bounds = array<i64: 1, 1>, scalar_prefetch = 0 : i64, scratch_operands = 1 : i64, tpu.core_type = #tpu.core_type<tc>, window_params = [{transform_indices = @transform_0, window_bounds = array<i64: 16, 128>}, {transform_indices = @transform_1, window_bounds = array<i64: 128, 128>}, {transform_indices = @transform_2, window_bounds = array<i64: 1, 128>}, {transform_indices = @transform_3, window_bounds = array<i64: 128, 128>}, {pipeline_mode = #tpu.pipeline_mode<synchronous>, transform_indices = @transform_4, window_bounds = array<i64: 1, 128>}, {transform_indices = @transform_5, window_bounds = array<i64: 16, 128>}]} {
    %c0_i32 = arith.constant 0 : i32
    %0 = arith.cmpi eq, %arg1, %c0_i32 : i32
    %1 = arith.extui %0 : i1 to i32
    %c0_i32_0 = arith.constant 0 : i32
    %2 = arith.cmpi ne, %1, %c0_i32_0 : i32
    scf.if %2 {
      %cst_19 = arith.constant 0.000000e+00 : f32
      %32 = vector.broadcast %cst_19 : f32 to vector<16x128xf32>
      %c0_20 = arith.constant 0 : index
      %c0_21 = arith.constant 0 : index
      %33 = vector.load %arg8[%c0_20, %c0_21] : memref<16x128xf32, #tpu.memory_space<vmem>>, vector<16x128xf32>
      tpu.vector_store %arg8[%c0_20, %c0_21], %32 {strides = array<i32>} : memref<16x128xf32, #tpu.memory_space<vmem>>, vector<16x128xf32>,
    } else {
    }
    %c0 = arith.constant 0 : index
    %c0_1 = arith.constant 0 : index
    %3 = vector.load %arg2[%c0, %c0_1] : memref<16x128xbf16, #tpu.memory_space<vmem>>, vector<16x128xbf16>
    %c0_2 = arith.constant 0 : index
    %c0_3 = arith.constant 0 : index
    %4 = vector.load %arg3[%c0_2, %c0_3] : memref<128x128xbf16, #tpu.memory_space<vmem>>, vector<128x128xbf16>
    %cst = arith.constant dense<0.000000e+00> : vector<16x128xf32>
    %5 = tpu.matmul %3, %4, %cst {dimension_numbers = #tpu.dot_dimension_numbers<[1], [0], [0], [1], [0, 0, 1, 1], [], []>} : vector<16x128xbf16>, vector<128x128xbf16>, vector<16x128xf32> -> vector<16x128xf32>
    %c0_4 = arith.constant 0 : index
    %c0_5 = arith.constant 0 : index
    %6 = vector.load %arg4[%c0_4, %c0_5] : memref<1x128xf32, #tpu.memory_space<vmem>>, vector<1x128xf32>
    %7 = vector.broadcast %6 : vector<1x128xf32> to vector<16x128xf32>
    %8 = arith.addf %5, %7 : vector<16x128xf32>
    %cst_6 = arith.constant 0.636619746 : f32
    %9 = math.sqrt %cst_6 : f32
    %cst_7 = arith.constant 5.000000e-01 : f32
    %10 = vector.broadcast %cst_7 : f32 to vector<16x128xf32>
    %11 = arith.mulf %10, %8 : vector<16x128xf32>
    %cst_8 = arith.constant 4.471500e-02 : f32
    %12 = vector.broadcast %cst_8 : f32 to vector<16x128xf32>
    %13 = arith.mulf %12, %8 : vector<16x128xf32>
    %14 = arith.mulf %13, %8 : vector<16x128xf32>
    %15 = arith.mulf %14, %8 : vector<16x128xf32>
    %16 = arith.addf %8, %15 : vector<16x128xf32>
    %17 = vector.broadcast %9 : f32 to vector<16x128xf32>
    %18 = arith.mulf %17, %16 : vector<16x128xf32>
    %19 = math.tanh %18 : vector<16x128xf32>
    %cst_9 = arith.constant 1.000000e+00 : f32
    %20 = vector.broadcast %cst_9 : f32 to vector<16x128xf32>
    %21 = arith.addf %20, %19 : vector<16x128xf32>
    %22 = arith.mulf %11, %21 : vector<16x128xf32>
    %c0_10 = arith.constant 0 : index
    %c0_11 = arith.constant 0 : index
    %23 = vector.load %arg8[%c0_10, %c0_11] : memref<16x128xf32, #tpu.memory_space<vmem>>, vector<16x128xf32>
    %24 = arith.truncf %22 : vector<16x128xf32> to vector<16x128xbf16>
    %c0_12 = arith.constant 0 : index
    %c0_13 = arith.constant 0 : index
    %25 = vector.load %arg5[%c0_12, %c0_13] : memref<128x128xbf16, #tpu.memory_space<vmem>>, vector<128x128xbf16>
    %cst_14 = arith.constant dense<0.000000e+00> : vector<16x128xf32>
    %26 = tpu.matmul %24, %25, %cst_14 {dimension_numbers = #tpu.dot_dimension_numbers<[1], [0], [0], [1], [0, 0, 1, 1], [], []>} : vector<16x128xbf16>, vector<128x128xbf16>, vector<16x128xf32> -> vector<16x128xf32>
    %27 = arith.addf %23, %26 : vector<16x128xf32>
    %c0_15 = arith.constant 0 : index
    %c0_16 = arith.constant 0 : index
    %28 = vector.load %arg8[%c0_15, %c0_16] : memref<16x128xf32, #tpu.memory_space<vmem>>, vector<16x128xf32>
    tpu.vector_store %arg8[%c0_15, %c0_16], %27 {strides = array<i32>} : memref<16x128xf32, #tpu.memory_space<vmem>>, vector<16x128xf32>,
    %c0_i32_17 = arith.constant 0 : i32
    %29 = arith.cmpi eq, %arg1, %c0_i32_17 : i32
    %30 = arith.extui %29 : i1 to i32
    %c0_i32_18 = arith.constant 0 : i32
    %31 = arith.cmpi ne, %30, %c0_i32_18 : i32
    scf.if %31 {
      %c0_19 = arith.constant 0 : index
      %c0_20 = arith.constant 0 : index
      %32 = vector.load %arg8[%c0_19, %c0_20] : memref<16x128xf32, #tpu.memory_space<vmem>>, vector<16x128xf32>
      %c0_21 = arith.constant 0 : index
      %c0_22 = arith.constant 0 : index
      %33 = vector.load %arg6[%c0_21, %c0_22] : memref<1x128xf32, #tpu.memory_space<vmem>>, vector<1x128xf32>
      %34 = vector.broadcast %33 : vector<1x128xf32> to vector<16x128xf32>
      %35 = arith.addf %32, %34 : vector<16x128xf32>
      %c0_23 = arith.constant 0 : index
      %c0_24 = arith.constant 0 : index
      %36 = vector.load %arg7[%c0_23, %c0_24] : memref<16x128xf32, #tpu.memory_space<vmem>>, vector<16x128xf32>
      tpu.vector_store %arg7[%c0_23, %c0_24], %35 {strides = array<i32>} : memref<16x128xf32, #tpu.memory_space<vmem>>, vector<16x128xf32>,
    } else {
    }
    return
  }
  func.func @transform_0(%arg0: i32, %arg1: i32) -> (i32, i32) {
    %c0_i32 = arith.constant 0 : i32
    %c0_i32_0 = arith.constant 0 : i32
    return %arg0, %c0_i32 : i32, i32
  }
  func.func @transform_1(%arg0: i32, %arg1: i32) -> (i32, i32) {
    %c0_i32 = arith.constant 0 : i32
    %c0_i32_0 = arith.constant 0 : i32
    return %c0_i32, %arg1 : i32, i32
  }
  func.func @transform_2(%arg0: i32, %arg1: i32) -> (i32, i32) {
    %c0_i32 = arith.constant 0 : i32
    %c0_i32_0 = arith.constant 0 : i32
    return %c0_i32, %arg1 : i32, i32
  }
  func.func @transform_3(%arg0: i32, %arg1: i32) -> (i32, i32) {
    %c0_i32 = arith.constant 0 : i32
    %c0_i32_0 = arith.constant 0 : i32
    return %arg1, %c0_i32 : i32, i32
  }
  func.func @transform_4(%arg0: i32, %arg1: i32) -> (i32, i32) {
    %c0_i32 = arith.constant 0 : i32
    %c0_i32_0 = arith.constant 0 : i32
    %c0_i32_1 = arith.constant 0 : i32
    return %c0_i32, %c0_i32_0 : i32, i32
  }
  func.func @transform_5(%arg0: i32, %arg1: i32) -> (i32, i32) {
    %c0_i32 = arith.constant 0 : i32
    %c0_i32_0 = arith.constant 0 : i32
    return %arg0, %c0_i32 : i32, i32
  }
}

</mosaic_0001>

<llo_original>
// kernel: tpu_custom_call.1
$region0: #{tpu_custom_call.1}
  #allocation0 [shape = 'u32[]', space=smem, size = 0x4, offset = 0x4, fixed_abs, tag = 'smem constant byte address 0x4 - core index']
  #allocation1 [shape = 'u32[72,128]{1,0:T(1,128)}', space=vmem, size = 0x9000, scoped, tag = 'internal scratch']
  #allocation2 [shape = 'f32[16,128]{1,0:T(8,128)}', space=vmem, size = 0x2000, scoped, tag = 'scratch operand']
  %s0 = inlined_call_operand.hbm [shape: bf16[16,128], index: 0, kind: input, shape index: {}]
  %s1 = inlined_call_operand.hbm [shape: bf16[128,128], index: 1, kind: input, shape index: {}]
  %s2 = inlined_call_operand.vmem [shape: f32[1,128], index: 2, kind: input, shape index: {}]
  %s3 = inlined_call_operand.hbm [shape: bf16[128,128], index: 3, kind: input, shape index: {}]
  %s4 = inlined_call_operand.vmem [shape: f32[1,128], index: 4, kind: input, shape index: {}]
  %s5 = inlined_call_operand.hbm [shape: f32[16,128], index: 5, kind: output, shape index: {}]
  %s6 = sld [smem:[#allocation0]]
  $region50: #{tpu_custom_call.1} parent=0
    _
  %s8 = ssub.s32 1, %s6
  %s9 = scalar_select 0, %s8, %s6
  $region1: #{tpu_custom_call.1} parent=0
    #allocation3 [shape = 'u8[4096]{0}', space=vmem, size = 0x1000, scoped, tag = 'input window, operand 0, single buffered']
    #allocation4 [shape = 's32[1]{0}', space=sflag, size = 0x4, scoped, tag = 'scoped memory for tpu_custom_call.1']
    #allocation5 [shape = 's32[1]{0}', space=sflag, size = 0x4, scoped, tag = 'scoped memory for tpu_custom_call.1']
    #allocation6 [shape = 'u8[32768]{0}', space=vmem, size = 0x8000, scoped, tag = 'input window, operand 1, single buffered']
    #allocation7 [shape = 's32[1]{0}', space=sflag, size = 0x4, scoped, tag = 'scoped memory for tpu_custom_call.1']
    #allocation8 [shape = 'u8[32768]{0}', space=vmem, size = 0x8000, scoped, tag = 'input window, operand 3, single buffered']
    #allocation9 [shape = 'u8[8192]{0}', space=vmem, size = 0x2000, scoped, tag = 'output window, operand 0, single buffered']
    %10 = vsyncpa [#allocation4], 0
    %11 = vsyncpa [#allocation7], 0
    %12 = vsyncpa [#allocation5], 0
    // Predicated region
    $region2: #{tpu_custom_call.1} parent=1 // pred_check
      _
    $region3: #{tpu_custom_call.1} parent=1 // pred_check_branch
      %14 = sbr.rel (0) target = $region5
    $region4: #{tpu_custom_call.1} parent=1 // pred_region
      %16 = vsyncadd [#allocation4], 0
      %s17 = sshll.u32 %s0, 4
      %s18 = int_to_ptr.hbm [resolvable:$true] %s17
      %s19 = sshll.u32 [#allocation3], 4
      %s20 = int_to_ptr.vmem [resolvable:$true] %s19
      %25 = dma.hbm_to_vmem [thread:$0]  %s18, 128, %s20, [#allocation4], 64, 64, 4
    $region5: #{tpu_custom_call.1} parent=1 // pred_fallthru
      _
    // Predicated region
    $region6: #{tpu_custom_call.1} parent=1 // pred_check
      _
    $region7: #{tpu_custom_call.1} parent=1 // pred_check_branch
      %27 = sbr.rel (0) target = $region9
    $region8: #{tpu_custom_call.1} parent=1 // pred_region
      %29 = vsyncadd [#allocation7], 0
      %s30 = sshll.u32 %s1, 4
      %s31 = int_to_ptr.hbm [resolvable:$true] %s30
      %s32 = sshll.u32 [#allocation6], 4
      %s33 = int_to_ptr.vmem [resolvable:$true] %s32
      %38 = dma.hbm_to_vmem [thread:$0]  %s31, 1024, %s33, [#allocation7], 64, 64, 4
    $region9: #{tpu_custom_call.1} parent=1 // pred_fallthru
      _
    // Predicated region
    $region10: #{tpu_custom_call.1} parent=1 // pred_check
      _
    $region11: #{tpu_custom_call.1} parent=1 // pred_check_branch
      %40 = sbr.rel (0) target = $region13
    $region12: #{tpu_custom_call.1} parent=1 // pred_region
      _
    $region13: #{tpu_custom_call.1} parent=1 // pred_fallthru
      _
    // Predicated region
    $region14: #{tpu_custom_call.1} parent=1 // pred_check
      _
    $region15: #{tpu_custom_call.1} parent=1 // pred_check_branch
      %42 = sbr.rel (0) target = $region17
    $region16: #{tpu_custom_call.1} parent=1 // pred_region
      %44 = vsyncadd [#allocation7], 0
      %s45 = sshll.u32 %s3, 4
      %s46 = int_to_ptr.hbm [resolvable:$true] %s45
      %s47 = sshll.u32 [#allocation8], 4
      %s48 = int_to_ptr.vmem [resolvable:$true] %s47
      %53 = dma.hbm_to_vmem [thread:$0]  %s46, 1024, %s48, [#allocation7], 64, 64, 4
    $region17: #{tpu_custom_call.1} parent=1 // pred_fallthru
      _
    // Predicated region
    $region18: #{tpu_custom_call.1} parent=1 // pred_check
      _
    $region19: #{tpu_custom_call.1} parent=1 // pred_check_branch
      %55 = sbr.rel (0) target = $region21
    $region20: #{tpu_custom_call.1} parent=1 // pred_region
      _
    $region21: #{tpu_custom_call.1} parent=1 // pred_fallthru
      _
    // Predicated region
    $region22: #{tpu_custom_call.1} parent=1 // pred_check
      _
    $region23: #{tpu_custom_call.1} parent=1 // pred_check_branch
      %57 = sbr.rel (0) target = $region25
    $region24: #{tpu_custom_call.1} parent=1 // pred_region
      %59 = dma.done [#allocation4], 128
    $region25: #{tpu_custom_call.1} parent=1 // pred_fallthru
      _
    // Predicated region
    $region26: #{tpu_custom_call.1} parent=1 // pred_check
      _
    $region27: #{tpu_custom_call.1} parent=1 // pred_check_branch
      %61 = sbr.rel (0) target = $region29
    $region28: #{tpu_custom_call.1} parent=1 // pred_region
      %63 = dma.done [#allocation7], 1024
    $region29: #{tpu_custom_call.1} parent=1 // pred_fallthru
      _
    // Predicated region
    $region30: #{tpu_custom_call.1} parent=1 // pred_check
      _
    $region31: #{tpu_custom_call.1} parent=1 // pred_check_branch
      %65 = sbr.rel (0) target = $region33
    $region32: #{tpu_custom_call.1} parent=1 // pred_region
      %67 = dma.done [#allocation7], 1024
    $region33: #{tpu_custom_call.1} parent=1 // pred_fallthru
      _
    %p68 = scmp.eq.s32.totalorder 0, 0
    // Predicated region
    $region34: #{tpu_custom_call.1} parent=1 // pred_check
      %p69 = pneg %p68
    $region35: #{tpu_custom_call.1} parent=1 // pred_check_branch
      %71 = sbr.rel (%p69) target = $region37
    $region36: #{tpu_custom_call.1} parent=1 // pred_region
      %72 = vst [vmem:[#allocation2] sm:$0xff] 0.0
      %73 = vst [vmem:[#allocation2 + $0x8] sm:$0xff] 0.0
    $region37: #{tpu_custom_call.1} parent=1 // pred_fallthru
      _
    %v74 = vld [vmem:[#allocation3] sm:$0xf]
    %v75 = vld [vmem:[#allocation3 + $0x4] sm:$0xf]
    %v76 = vld [vmem:[#allocation6] sm:$0xf]
    %v77 = vld [vmem:[#allocation6 + $0x4] sm:$0xf]
    %v78 = vld [vmem:[#allocation6 + $0x8] sm:$0xf]
    %v79 = vld [vmem:[#allocation6 + $0xc] sm:$0xf]
    %v80 = vld [vmem:[#allocation6 + $0x10] sm:$0xf]
    %v81 = vld [vmem:[#allocation6 + $0x14] sm:$0xf]
    %v82 = vld [vmem:[#allocation6 + $0x18] sm:$0xf]
    %v83 = vld [vmem:[#allocation6 + $0x1c] sm:$0xf]
    %v84 = vld [vmem:[#allocation6 + $0x20] sm:$0xf]
    %v85 = vld [vmem:[#allocation6 + $0x24] sm:$0xf]
    %v86 = vld [vmem:[#allocation6 + $0x28] sm:$0xf]
    %v87 = vld [vmem:[#allocation6 + $0x2c] sm:$0xf]
    %v88 = vld [vmem:[#allocation6 + $0x30] sm:$0xf]
    %v89 = vld [vmem:[#allocation6 + $0x34] sm:$0xf]
    %v90 = vld [vmem:[#allocation6 + $0x38] sm:$0xf]
    %v91 = vld [vmem:[#allocation6 + $0x3c] sm:$0xf]
    %v92 = vld [vmem:[%s2] sm:$0x1]
    %v94 = vperm.slane %v92, 0
    %v98 = vunpack.c.l.b16 %v74
    %v99 = vunpack.c.l.b16 %v75
    %v100 = vpack.c.b16 %v99, %v98
    %v118 = vunpack.c.l.b16 %v76
    %v119 = vunpack.c.l.b16 %v77
    %v120 = vunpack.c.l.b16 %v78
    %v121 = vunpack.c.l.b16 %v79
    %v122 = vunpack.c.l.b16 %v80
    %v123 = vunpack.c.l.b16 %v81
    %v124 = vunpack.c.l.b16 %v82
    %v125 = vunpack.c.l.b16 %v83
    %v126 = vunpack.c.l.b16 %v84
    %v127 = vunpack.c.l.b16 %v85
    %v128 = vunpack.c.l.b16 %v86
    %v129 = vunpack.c.l.b16 %v87
    %v130 = vunpack.c.l.b16 %v88
    %v131 = vunpack.c.l.b16 %v89
    %v132 = vunpack.c.l.b16 %v90
    %v133 = vunpack.c.l.b16 %v91
    %v134 = vpack.c.b16 %v119, %v118
    %v135 = vpack.c.b16 %v121, %v120
    %v136 = vpack.c.b16 %v123, %v122
    %v137 = vpack.c.b16 %v125, %v124
    %v138 = vpack.c.b16 %v127, %v126
    %v139 = vpack.c.b16 %v129, %v128
    %v140 = vpack.c.b16 %v131, %v130
    %v141 = vpack.c.b16 %v133, %v132
    %150 = vmatpush.bf16.msra.mxu0 %v141
    %151 = vmatpush.bf16.msra.mxu0 %v140
    %152 = vmatpush.bf16.msra.mxu0 %v139
    %153 = vmatpush.bf16.msra.mxu0 %v138
    %154 = vmatpush.bf16.msra.mxu0 %v137
    %155 = vmatpush.bf16.msra.mxu0 %v136
    %156 = vmatpush.bf16.msra.mxu0 %v135
    %157 = vmatpush.bf16.msra.mxu0 %v134
    %158 = vmatmul.bf16.gmra.mxu0 %v100
    %v159 = vpop.f32.mrf.mxu0
    %v160 = vadd.f32 %v94, %v159
    %v161 = vpop.f32.mrf.mxu0
    %v162 = vadd.f32 %v94, %v161
    %163 = vdwg.mxu0
    %v164 = vmul.f32 %v160, 0.5
    %v165 = vmul.f32 %v162, 0.5
    %v166 = vmul.f32 %v160, 0.044715
    %v167 = vmul.f32 %v162, 0.044715
    %v168 = vmul.f32 %v166, %v160
    %v169 = vmul.f32 %v167, %v162
    %v170 = vmul.f32 %v168, %v160
    %v171 = vmul.f32 %v169, %v162
    %v172 = vadd.f32 %v160, %v170
    %v173 = vadd.f32 %v162, %v171
    %v174 = vmul.f32 %v172, 0.7978845
    %v175 = vmul.f32 %v173, 0.7978845
    %v176 = vtanh.pop %v174
    %v177 = vtanh.pop %v175
    %v178 = vadd.f32 %v176, 1.0
    %v179 = vadd.f32 %v177, 1.0
    %v180 = vmul.f32 %v164, %v178
    %v181 = vmul.f32 %v165, %v179
    %v182 = vld [vmem:[#allocation2] sm:$0xff]
    %v183 = vld [vmem:[#allocation2 + $0x8] sm:$0xff]
    %v184 = vpack.c.bf16 %v181, %v180
    %v185 = vld [vmem:[#allocation8] sm:$0xf]
    %v186 = vld [vmem:[#allocation8 + $0x4] sm:$0xf]
    %v187 = vld [vmem:[#allocation8 + $0x8] sm:$0xf]
    %v188 = vld [vmem:[#allocation8 + $0xc] sm:$0xf]
    %v189 = vld [vmem:[#allocation8 + $0x10] sm:$0xf]
    %v190 = vld [vmem:[#allocation8 + $0x14] sm:$0xf]
    %v191 = vld [vmem:[#allocation8 + $0x18] sm:$0xf]
    %v192 = vld [vmem:[#allocation8 + $0x1c] sm:$0xf]
    %v193 = vld [vmem:[#allocation8 + $0x20] sm:$0xf]
    %v194 = vld [vmem:[#allocation8 + $0x24] sm:$0xf]
    %v195 = vld [vmem:[#allocation8 + $0x28] sm:$0xf]
    %v196 = vld [vmem:[#allocation8 + $0x2c] sm:$0xf]
    %v197 = vld [vmem:[#allocation8 + $0x30] sm:$0xf]
    %v198 = vld [vmem:[#allocation8 + $0x34] sm:$0xf]
    %v199 = vld [vmem:[#allocation8 + $0x38] sm:$0xf]
    %v200 = vld [vmem:[#allocation8 + $0x3c] sm:$0xf]
    %v217 = vunpack.c.l.b16 %v185
    %v218 = vunpack.c.l.b16 %v186
    %v219 = vunpack.c.l.b16 %v187
    %v220 = vunpack.c.l.b16 %v188
    %v221 = vunpack.c.l.b16 %v189
    %v222 = vunpack.c.l.b16 %v190
    %v223 = vunpack.c.l.b16 %v191
    %v224 = vunpack.c.l.b16 %v192
    %v225 = vunpack.c.l.b16 %v193
    %v226 = vunpack.c.l.b16 %v194
    %v227 = vunpack.c.l.b16 %v195
    %v228 = vunpack.c.l.b16 %v196
    %v229 = vunpack.c.l.b16 %v197
    %v230 = vunpack.c.l.b16 %v198
    %v231 = vunpack.c.l.b16 %v199
    %v232 = vunpack.c.l.b16 %v200
    %v233 = vpack.c.b16 %v218, %v217
    %v234 = vpack.c.b16 %v220, %v219
    %v235 = vpack.c.b16 %v222, %v221
    %v236 = vpack.c.b16 %v224, %v223
    %v237 = vpack.c.b16 %v226, %v225
    %v238 = vpack.c.b16 %v228, %v227
    %v239 = vpack.c.b16 %v230, %v229
    %v240 = vpack.c.b16 %v232, %v231
    %249 = vmatpush.bf16.msra.mxu0 %v240
    %250 = vmatpush.bf16.msra.mxu0 %v239
    %251 = vmatpush.bf16.msra.mxu0 %v238
    %252 = vmatpush.bf16.msra.mxu0 %v237
    %253 = vmatpush.bf16.msra.mxu0 %v236
    %254 = vmatpush.bf16.msra.mxu0 %v235
    %255 = vmatpush.bf16.msra.mxu0 %v234
    %256 = vmatpush.bf16.msra.mxu0 %v233
    %257 = vmatmul.bf16.gmra.mxu0 %v184
    %v258 = vpop.f32.mrf.mxu0
    %v259 = vadd.f32 0.0, %v258
    %v260 = vpop.f32.mrf.mxu0
    %v261 = vadd.f32 0.0, %v260
    %262 = vdwg.mxu0
    %v263 = vadd.f32 %v182, %v259
    %v264 = vadd.f32 %v183, %v261
    %265 = vst [vmem:[#allocation2] sm:$0xff] %v263
    %266 = vst [vmem:[#allocation2 + $0x8] sm:$0xff] %v264
    // Predicated region
    $region38: #{tpu_custom_call.1} parent=1 // pred_check
      %p267 = pneg %p68
    $region39: #{tpu_custom_call.1} parent=1 // pred_check_branch
      %269 = sbr.rel (%p267) target = $region41
    $region40: #{tpu_custom_call.1} parent=1 // pred_region
      %v270 = vld [vmem:[#allocation2] sm:$0xff]
      %v271 = vld [vmem:[#allocation2 + $0x8] sm:$0xff]
      %v272 = vld [vmem:[%s4] sm:$0x1]
      %v274 = vperm.slane %v272, 0
      %v276 = vadd.f32 %v270, %v274
      %v277 = vadd.f32 %v271, %v274
      %278 = vst [vmem:[#allocation9] sm:$0xff] %v276
      %279 = vst [vmem:[#allocation9 + $0x8] sm:$0xff] %v277
    $region41: #{tpu_custom_call.1} parent=1 // pred_fallthru
      _
    // Predicated region
    $region42: #{tpu_custom_call.1} parent=1 // pred_check
      _
    $region43: #{tpu_custom_call.1} parent=1 // pred_check_branch
      %281 = sbr.rel (0) target = $region45
    $region44: #{tpu_custom_call.1} parent=1 // pred_region
      %283 = vsyncadd [#allocation5], 0
      %s284 = sshll.u32 [#allocation9], 4
      %s285 = int_to_ptr.vmem [resolvable:$true] %s284
      %s286 = sshll.u32 %s5, 4
      %s287 = int_to_ptr.hbm [resolvable:$true] %s286
      %292 = dma.vmem_to_hbm [thread:$0]  %s285, 256, %s287, [#allocation5], 128, 128, 8
    $region45: #{tpu_custom_call.1} parent=1 // pred_fallthru
      _
    // Predicated region
    $region46: #{tpu_custom_call.1} parent=1 // pred_check
      _
    $region47: #{tpu_custom_call.1} parent=1 // pred_check_branch
      %294 = sbr.rel (0) target = $region49
    $region48: #{tpu_custom_call.1} parent=1 // pred_region
      %296 = dma.done [#allocation5], 256
    $region49: #{tpu_custom_call.1} parent=1 // pred_fallthru
      _
    %297 = vsyncpa [#allocation4], 1
    %298 = vsyncpa [#allocation7], 1
    %299 = vsyncpa [#allocation5], 1

</llo_original>
